<compile_context>
chip_gen: v7x
topology: tpu7x:2x2x1
jax: 0.10.0
libtpu: 0.0.40
codegen_flags: <defaults>
</compile_context>

<pallas_src>
import functools

import jax
import jax.numpy as jnp
from jax import lax
from jax.experimental import pallas as pl
from jax.experimental.pallas import tpu as pltpu


def _lstm_maxpool_kernel(x_ref, wih_ref, whh_ref, b_ref, out_ref, gates_sc,
                         *, T, B, H):
    # ---- parallel part: input projection for ALL timesteps in one MXU matmul
    # (T*B, D) @ (D, 4H) + (1, 4H)  ->  (T*B, 4H), stored to VMEM scratch.
    gates_sc[...] = (
        jnp.dot(x_ref[...], wih_ref[...], preferred_element_type=jnp.float32)
        + b_ref[...]
    )

    whh = whh_ref[...]  # (H, 4H), hoisted out of the recurrence loop

    # ---- serial part: recurrence over time, state carried in vregs
    def step(t, carry):
        h, c, mx = carry
        row = pl.multiple_of(t * B, B)  # sublane-aligned dynamic slice
        gates = gates_sc[pl.ds(row, B), :] + jnp.dot(
            h, whh, preferred_element_type=jnp.float32)          # (B, 4H)

        # full-vreg transcendentals (4H == 128 lanes), slice afterwards
        sig = jax.nn.sigmoid(gates)
        tnh = jnp.tanh(gates)
        i_g = sig[:, 0 * H:1 * H]
        f_g = sig[:, 1 * H:2 * H]
        g_g = tnh[:, 2 * H:3 * H]
        o_g = sig[:, 3 * H:4 * H]

        c = f_g * c + i_g * g_g
        h = o_g * jnp.tanh(c)
        mx = jnp.maximum(mx, h)  # running max over time (max_pool1d)
        return h, c, mx

    h0 = jnp.zeros((B, H), jnp.float32)
    c0 = jnp.zeros((B, H), jnp.float32)
    mx0 = jnp.full((B, H), -jnp.inf, jnp.float32)
    _, _, mx = lax.fori_loop(0, T, step, (h0, c0, mx0), unroll=True)

    out_ref[...] = mx.astype(out_ref.dtype)


def lstm_forward(x_ids, embed_w, w_ih, w_hh, b_ih, b_hh):
    """x_ids: (B, T) int32. Returns (B, H) float32."""
    B, T = x_ids.shape
    V, D = embed_w.shape
    H = w_hh.shape[1]
    assert w_ih.shape == (4 * H, D) and w_hh.shape == (4 * H, H)

    # pad batch to the sublane tile (multiple of 8)
    B_pad = max(8, -(-B // 8) * 8)

    # --- glue: embedding gather done directly in time-major (transpose the
    # tiny id matrix, not the embedded activations), then flatten (contiguous).
    ids_tm = jnp.pad(x_ids.T, ((0, 0), (0, B_pad - B)))   # (T, B_pad)
    x_tm = jnp.take(embed_w, ids_tm, axis=0)              # (T, B_pad, D)
    x_flat = x_tm.reshape(T * B_pad, D).astype(jnp.float32)

    wih_t = w_ih.T.astype(jnp.float32)                    # (D, 4H)
    whh_t = w_hh.T.astype(jnp.float32)                    # (H, 4H)
    bias = (b_ih + b_hh).reshape(1, 4 * H).astype(jnp.float32)
    # TODO(synk): at realistic H, cast x_flat/wih_t/whh_t to bf16 (f32 accum)
    # and tile the 4H axis to respect v7x's 64 MiB VMEM.

    kernel = functools.partial(_lstm_maxpool_kernel, T=T, B=B_pad, H=H)

    out = pl.pallas_call(
        kernel,
        out_shape=jax.ShapeDtypeStruct((B_pad, H), jnp.float32),
        grid_spec=pltpu.PrefetchScalarGridSpec(
            num_scalar_prefetch=0,
            grid=(1,),  # whole problem resident; time iterated in-kernel
            in_specs=[
                pl.BlockSpec((T * B_pad, D), lambda i: (0, 0)),  # all timesteps
                pl.BlockSpec((D, 4 * H), lambda i: (0, 0)),      # W_ih^T
                pl.BlockSpec((H, 4 * H), lambda i: (0, 0)),      # W_hh^T
                pl.BlockSpec((1, 4 * H), lambda i: (0, 0)),      # bias
            ],
            out_specs=pl.BlockSpec((B_pad, H), lambda i: (0, 0)),
            scratch_shapes=[
                pltpu.VMEM((T * B_pad, 4 * H), jnp.float32),     # hoisted gates
            ],
        ),
        compiler_params=pltpu.CompilerParams(
            dimension_semantics=("arbitrary",),
        ),
    )(x_flat, wih_t, whh_t, bias)
    return out[:B]


def _reference(x_ids, embed_w, w_ih, w_hh, b_ih, b_hh):
    """Pure-JAX reference mirroring the PyTorch module."""
    x = jnp.take(embed_w, x_ids, axis=0)  # (B, T, D)
    B, T, D = x.shape
    H = w_hh.shape[1]
    h = jnp.zeros((B, H), jnp.float32)
    c = jnp.zeros((B, H), jnp.float32)
    outs = []
    for t in range(T):
        gates = x[:, t, :] @ w_ih.T + h @ w_hh.T + b_ih + b_hh
        i = jax.nn.sigmoid(gates[:, 0 * H:1 * H])
        f = jax.nn.sigmoid(gates[:, 1 * H:2 * H])
        g = jnp.tanh(gates[:, 2 * H:3 * H])
        o = jax.nn.sigmoid(gates[:, 3 * H:4 * H])
        c = f * c + i * g
        h = o * jnp.tanh(c)
        outs.append(h)
    out = jnp.stack(outs, axis=1)  # (B, T, H)
    return jnp.max(out, axis=1)    # max_pool1d over the full time dim, squeezed


if __name__ == "__main__":
    # args: embed_num=32 (vocab), embed_dim=32, hidden_size=32; batch=2, seq=8
    V, D, H = 32, 32, 32
    B, T = 2, 8

    key = jax.random.PRNGKey(0)
    k_emb, k_wih, k_whh, k_bih, k_bhh, k_ids = jax.random.split(key, 6)

    embed_w = jax.random.normal(k_emb, (V, D), jnp.float32)
    w_ih = jax.random.normal(k_wih, (4 * H, D), jnp.float32) * 0.1
    w_hh = jax.random.normal(k_whh, (4 * H, H), jnp.float32) * 0.1
    b_ih = jax.random.normal(k_bih, (4 * H,), jnp.float32) * 0.1
    b_hh = jax.random.normal(k_bhh, (4 * H,), jnp.float32) * 0.1

    x_ids = jax.random.randint(k_ids, (B, T), 0, V, dtype=jnp.int32)

    out = lstm_forward(x_ids, embed_w, w_ih, w_hh, b_ih, b_hh)
    out = jax.block_until_ready(out)

    ref = _reference(x_ids, embed_w, w_ih, w_hh, b_ih, b_hh)
    assert out.shape == (B, H)
    assert jnp.allclose(out, ref, atol=1e-5, rtol=1e-5)

    print("KERNEL_OK")
</pallas_src>

<mosaic_0001>
module attributes {stable_mosaic.version = 11 : i64} {
  func.func @_lstm_maxpool_kernel(%arg0: i32, %arg1: memref<64x32xf32, #tpu.memory_space<vmem>>, %arg2: memref<32x128xf32, #tpu.memory_space<vmem>>, %arg3: memref<32x128xf32, #tpu.memory_space<vmem>>, %arg4: memref<1x128xf32, #tpu.memory_space<vmem>>, %arg5: memref<8x32xf32, #tpu.memory_space<vmem>>, %arg6: memref<64x128xf32, #tpu.memory_space<vmem>>) attributes {dimension_semantics = [#tpu.dimension_semantics<arbitrary>], iteration_bounds = array<i64: 1>, scalar_prefetch = 0 : i64, scratch_operands = 1 : i64, tpu.core_type = #tpu.core_type<tc>, window_params = [{pipeline_mode = #tpu.pipeline_mode<synchronous>, transform_indices = @transform_0, window_bounds = array<i64: 64, 32>}, {pipeline_mode = #tpu.pipeline_mode<synchronous>, transform_indices = @transform_1, window_bounds = array<i64: 32, 128>}, {pipeline_mode = #tpu.pipeline_mode<synchronous>, transform_indices = @transform_2, window_bounds = array<i64: 32, 128>}, {pipeline_mode = #tpu.pipeline_mode<synchronous>, transform_indices = @transform_3, window_bounds = array<i64: 1, 128>}, {pipeline_mode = #tpu.pipeline_mode<synchronous>, transform_indices = @transform_4, window_bounds = array<i64: 8, 32>}]} {
    %c0 = arith.constant 0 : index
    %c0_0 = arith.constant 0 : index
    %0 = vector.load %arg1[%c0, %c0_0] : memref<64x32xf32, #tpu.memory_space<vmem>>, vector<64x32xf32>
    %c0_1 = arith.constant 0 : index
    %c0_2 = arith.constant 0 : index
    %1 = vector.load %arg2[%c0_1, %c0_2] : memref<32x128xf32, #tpu.memory_space<vmem>>, vector<32x128xf32>
    %cst = arith.constant dense<0.000000e+00> : vector<64x128xf32>
    %2 = tpu.matmul %0, %1, %cst {dimension_numbers = #tpu.dot_dimension_numbers<[1], [0], [0], [1], [0, 0, 1, 1], [], []>} : vector<64x32xf32>, vector<32x128xf32>, vector<64x128xf32> -> vector<64x128xf32>
    %c0_3 = arith.constant 0 : index
    %c0_4 = arith.constant 0 : index
    %3 = vector.load %arg4[%c0_3, %c0_4] : memref<1x128xf32, #tpu.memory_space<vmem>>, vector<1x128xf32>
    %4 = vector.broadcast %3 : vector<1x128xf32> to vector<64x128xf32>
    %5 = arith.addf %2, %4 : vector<64x128xf32>
    %c0_5 = arith.constant 0 : index
    %c0_6 = arith.constant 0 : index
    %6 = vector.load %arg6[%c0_5, %c0_6] : memref<64x128xf32, #tpu.memory_space<vmem>>, vector<64x128xf32>
    tpu.vector_store %arg6[%c0_5, %c0_6], %5 {strides = array<i32>} : memref<64x128xf32, #tpu.memory_space<vmem>>, vector<64x128xf32>,
    %c0_7 = arith.constant 0 : index
    %c0_8 = arith.constant 0 : index
    %7 = vector.load %arg3[%c0_7, %c0_8] : memref<32x128xf32, #tpu.memory_space<vmem>>, vector<32x128xf32>
    %cst_9 = arith.constant 0.000000e+00 : f32
    %8 = vector.broadcast %cst_9 : f32 to vector<8x32xf32>
    %cst_10 = arith.constant 0.000000e+00 : f32
    %9 = vector.broadcast %cst_10 : f32 to vector<8x32xf32>
    %cst_11 = arith.constant 0xFF800000 : f32
    %10 = vector.broadcast %cst_11 : f32 to vector<8x32xf32>
    %c0_i32 = arith.constant 0 : i32
    %c8_i32 = arith.constant 8 : i32
    %11 = arith.muli %c0_i32, %c8_i32 : i32
    %12 = tpu.assume_multiple %11, 8 : i32
    %13 = arith.index_cast %12 : i32 to index
    %c0_12 = arith.constant 0 : index
    %14 = vector.load %arg6[%13, %c0_12] : memref<64x128xf32, #tpu.memory_space<vmem>>, vector<8x128xf32>
    %cst_13 = arith.constant dense<0.000000e+00> : vector<8x128xf32>
    %15 = tpu.matmul %8, %7, %cst_13 {dimension_numbers = #tpu.dot_dimension_numbers<[1], [0], [0], [1], [0, 0, 1, 1], [], []>} : vector<8x32xf32>, vector<32x128xf32>, vector<8x128xf32> -> vector<8x128xf32>
    %16 = arith.addf %14, %15 : vector<8x128xf32>
    %17 = arith.negf %16 : vector<8x128xf32>
    %18 = math.exp %17 : vector<8x128xf32>
    %cst_14 = arith.constant 1.000000e+00 : f32
    %19 = vector.broadcast %cst_14 : f32 to vector<8x128xf32>
    %20 = arith.addf %19, %18 : vector<8x128xf32>
    %21 = arith.divf %19, %20 : vector<8x128xf32>
    %22 = math.tanh %16 : vector<8x128xf32>
    %23 = vector.extract_strided_slice %21 {offsets = [0, 0], sizes = [8, 32], strides = [1, 1]} : vector<8x128xf32> to vector<8x32xf32>
    %24 = vector.extract_strided_slice %21 {offsets = [0, 32], sizes = [8, 32], strides = [1, 1]} : vector<8x128xf32> to vector<8x32xf32>
    %25 = vector.extract_strided_slice %22 {offsets = [0, 64], sizes = [8, 32], strides = [1, 1]} : vector<8x128xf32> to vector<8x32xf32>
    %26 = vector.extract_strided_slice %21 {offsets = [0, 96], sizes = [8, 32], strides = [1, 1]} : vector<8x128xf32> to vector<8x32xf32>
    %27 = arith.mulf %24, %9 : vector<8x32xf32>
    %28 = arith.mulf %23, %25 : vector<8x32xf32>
    %29 = arith.addf %27, %28 : vector<8x32xf32>
    %30 = math.tanh %29 : vector<8x32xf32>
    %31 = arith.mulf %26, %30 : vector<8x32xf32>
    %32 = arith.maximumf %10, %31 : vector<8x32xf32>
    %c1_i32 = arith.constant 1 : i32
    %c8_i32_15 = arith.constant 8 : i32
    %33 = arith.muli %c1_i32, %c8_i32_15 : i32
    %34 = tpu.assume_multiple %33, 8 : i32
    %35 = arith.index_cast %34 : i32 to index
    %c0_16 = arith.constant 0 : index
    %36 = vector.load %arg6[%35, %c0_16] : memref<64x128xf32, #tpu.memory_space<vmem>>, vector<8x128xf32>
    %cst_17 = arith.constant dense<0.000000e+00> : vector<8x128xf32>
    %37 = tpu.matmul %31, %7, %cst_17 {dimension_numbers = #tpu.dot_dimension_numbers<[1], [0], [0], [1], [0, 0, 1, 1], [], []>} : vector<8x32xf32>, vector<32x128xf32>, vector<8x128xf32> -> vector<8x128xf32>
    %38 = arith.addf %36, %37 : vector<8x128xf32>
    %39 = arith.negf %38 : vector<8x128xf32>
    %40 = math.exp %39 : vector<8x128xf32>
    %cst_18 = arith.constant 1.000000e+00 : f32
    %41 = vector.broadcast %cst_18 : f32 to vector<8x128xf32>
    %42 = arith.addf %41, %40 : vector<8x128xf32>
    %43 = arith.divf %41, %42 : vector<8x128xf32>
    %44 = math.tanh %38 : vector<8x128xf32>
    %45 = vector.extract_strided_slice %43 {offsets = [0, 0], sizes = [8, 32], strides = [1, 1]} : vector<8x128xf32> to vector<8x32xf32>
    %46 = vector.extract_strided_slice %43 {offsets = [0, 32], sizes = [8, 32], strides = [1, 1]} : vector<8x128xf32> to vector<8x32xf32>
    %47 = vector.extract_strided_slice %44 {offsets = [0, 64], sizes = [8, 32], strides = [1, 1]} : vector<8x128xf32> to vector<8x32xf32>
    %48 = vector.extract_strided_slice %43 {offsets = [0, 96], sizes = [8, 32], strides = [1, 1]} : vector<8x128xf32> to vector<8x32xf32>
    %49 = arith.mulf %46, %29 : vector<8x32xf32>
    %50 = arith.mulf %45, %47 : vector<8x32xf32>
    %51 = arith.addf %49, %50 : vector<8x32xf32>
    %52 = math.tanh %51 : vector<8x32xf32>
    %53 = arith.mulf %48, %52 : vector<8x32xf32>
    %54 = arith.maximumf %32, %53 : vector<8x32xf32>
    %c2_i32 = arith.constant 2 : i32
    %c8_i32_19 = arith.constant 8 : i32
    %55 = arith.muli %c2_i32, %c8_i32_19 : i32
    %56 = tpu.assume_multiple %55, 8 : i32
    %57 = arith.index_cast %56 : i32 to index
    %c0_20 = arith.constant 0 : index
    %58 = vector.load %arg6[%57, %c0_20] : memref<64x128xf32, #tpu.memory_space<vmem>>, vector<8x128xf32>
    %cst_21 = arith.constant dense<0.000000e+00> : vector<8x128xf32>
    %59 = tpu.matmul %53, %7, %cst_21 {dimension_numbers = #tpu.dot_dimension_numbers<[1], [0], [0], [1], [0, 0, 1, 1], [], []>} : vector<8x32xf32>, vector<32x128xf32>, vector<8x128xf32> -> vector<8x128xf32>
    %60 = arith.addf %58, %59 : vector<8x128xf32>
    %61 = arith.negf %60 : vector<8x128xf32>
    %62 = math.exp %61 : vector<8x128xf32>
    %cst_22 = arith.constant 1.000000e+00 : f32
    %63 = vector.broadcast %cst_22 : f32 to vector<8x128xf32>
    %64 = arith.addf %63, %62 : vector<8x128xf32>
    %65 = arith.divf %63, %64 : vector<8x128xf32>
    %66 = math.tanh %60 : vector<8x128xf32>
    %67 = vector.extract_strided_slice %65 {offsets = [0, 0], sizes = [8, 32], strides = [1, 1]} : vector<8x128xf32> to vector<8x32xf32>
    %68 = vector.extract_strided_slice %65 {offsets = [0, 32], sizes = [8, 32], strides = [1, 1]} : vector<8x128xf32> to vector<8x32xf32>
    %69 = vector.extract_strided_slice %66 {offsets = [0, 64], sizes = [8, 32], strides = [1, 1]} : vector<8x128xf32> to vector<8x32xf32>
    %70 = vector.extract_strided_slice %65 {offsets = [0, 96], sizes = [8, 32], strides = [1, 1]} : vector<8x128xf32> to vector<8x32xf32>
    %71 = arith.mulf %68, %51 : vector<8x32xf32>
    %72 = arith.mulf %67, %69 : vector<8x32xf32>
    %73 = arith.addf %71, %72 : vector<8x32xf32>
    %74 = math.tanh %73 : vector<8x32xf32>
    %75 = arith.mulf %70, %74 : vector<8x32xf32>
    %76 = arith.maximumf %54, %75 : vector<8x32xf32>
    %c3_i32 = arith.constant 3 : i32
    %c8_i32_23 = arith.constant 8 : i32
    %77 = arith.muli %c3_i32, %c8_i32_23 : i32
    %78 = tpu.assume_multiple %77, 8 : i32
    %79 = arith.index_cast %78 : i32 to index
    %c0_24 = arith.constant 0 : index
    %80 = vector.load %arg6[%79, %c0_24] : memref<64x128xf32, #tpu.memory_space<vmem>>, vector<8x128xf32>
    %cst_25 = arith.constant dense<0.000000e+00> : vector<8x128xf32>
    %81 = tpu.matmul %75, %7, %cst_25 {dimension_numbers = #tpu.dot_dimension_numbers<[1], [0], [0], [1], [0, 0, 1, 1], [], []>} : vector<8x32xf32>, vector<32x128xf32>, vector<8x128xf32> -> vector<8x128xf32>
    %82 = arith.addf %80, %81 : vector<8x128xf32>
    %83 = arith.negf %82 : vector<8x128xf32>
    %84 = math.exp %83 : vector<8x128xf32>
    %cst_26 = arith.constant 1.000000e+00 : f32
    %85 = vector.broadcast %cst_26 : f32 to vector<8x128xf32>
    %86 = arith.addf %85, %84 : vector<8x128xf32>
    %87 = arith.divf %85, %86 : vector<8x128xf32>
    %88 = math.tanh %82 : vector<8x128xf32>
    %89 = vector.extract_strided_slice %87 {offsets = [0, 0], sizes = [8, 32], strides = [1, 1]} : vector<8x128xf32> to vector<8x32xf32>
    %90 = vector.extract_strided_slice %87 {offsets = [0, 32], sizes = [8, 32], strides = [1, 1]} : vector<8x128xf32> to vector<8x32xf32>
    %91 = vector.extract_strided_slice %88 {offsets = [0, 64], sizes = [8, 32], strides = [1, 1]} : vector<8x128xf32> to vector<8x32xf32>
    %92 = vector.extract_strided_slice %87 {offsets = [0, 96], sizes = [8, 32], strides = [1, 1]} : vector<8x128xf32> to vector<8x32xf32>
    %93 = arith.mulf %90, %73 : vector<8x32xf32>
    %94 = arith.mulf %89, %91 : vector<8x32xf32>
    %95 = arith.addf %93, %94 : vector<8x32xf32>
    %96 = math.tanh %95 : vector<8x32xf32>
    %97 = arith.mulf %92, %96 : vector<8x32xf32>
    %98 = arith.maximumf %76, %97 : vector<8x32xf32>
    %c4_i32 = arith.constant 4 : i32
    %c8_i32_27 = arith.constant 8 : i32
    %99 = arith.muli %c4_i32, %c8_i32_27 : i32
    %100 = tpu.assume_multiple %99, 8 : i32
    %101 = arith.index_cast %100 : i32 to index
    %c0_28 = arith.constant 0 : index
    %102 = vector.load %arg6[%101, %c0_28] : memref<64x128xf32, #tpu.memory_space<vmem>>, vector<8x128xf32>
    %cst_29 = arith.constant dense<0.000000e+00> : vector<8x128xf32>
    %103 = tpu.matmul %97, %7, %cst_29 {dimension_numbers = #tpu.dot_dimension_numbers<[1], [0], [0], [1], [0, 0, 1, 1], [], []>} : vector<8x32xf32>, vector<32x128xf32>, vector<8x128xf32> -> vector<8x128xf32>
    %104 = arith.addf %102, %103 : vector<8x128xf32>
    %105 = arith.negf %104 : vector<8x128xf32>
    %106 = math.exp %105 : vector<8x128xf32>
    %cst_30 = arith.constant 1.000000e+00 : f32
    %107 = vector.broadcast %cst_30 : f32 to vector<8x128xf32>
    %108 = arith.addf %107, %106 : vector<8x128xf32>
    %109 = arith.divf %107, %108 : vector<8x128xf32>
    %110 = math.tanh %104 : vector<8x128xf32>
    %111 = vector.extract_strided_slice %109 {offsets = [0, 0], sizes = [8, 32], strides = [1, 1]} : vector<8x128xf32> to vector<8x32xf32>
    %112 = vector.extract_strided_slice %109 {offsets = [0, 32], sizes = [8, 32], strides = [1, 1]} : vector<8x128xf32> to vector<8x32xf32>
    %113 = vector.extract_strided_slice %110 {offsets = [0, 64], sizes = [8, 32], strides = [1, 1]} : vector<8x128xf32> to vector<8x32xf32>
    %114 = vector.extract_strided_slice %109 {offsets = [0, 96], sizes = [8, 32], strides = [1, 1]} : vector<8x128xf32> to vector<8x32xf32>
    %115 = arith.mulf %112, %95 : vector<8x32xf32>
    %116 = arith.mulf %111, %113 : vector<8x32xf32>
    %117 = arith.addf %115, %116 : vector<8x32xf32>
    %118 = math.tanh %117 : vector<8x32xf32>
    %119 = arith.mulf %114, %118 : vector<8x32xf32>
    %120 = arith.maximumf %98, %119 : vector<8x32xf32>
    %c5_i32 = arith.constant 5 : i32
    %c8_i32_31 = arith.constant 8 : i32
    %121 = arith.muli %c5_i32, %c8_i32_31 : i32
    %122 = tpu.assume_multiple %121, 8 : i32
    %123 = arith.index_cast %122 : i32 to index
    %c0_32 = arith.constant 0 : index
    %124 = vector.load %arg6[%123, %c0_32] : memref<64x128xf32, #tpu.memory_space<vmem>>, vector<8x128xf32>
    %cst_33 = arith.constant dense<0.000000e+00> : vector<8x128xf32>
    %125 = tpu.matmul %119, %7, %cst_33 {dimension_numbers = #tpu.dot_dimension_numbers<[1], [0], [0], [1], [0, 0, 1, 1], [], []>} : vector<8x32xf32>, vector<32x128xf32>, vector<8x128xf32> -> vector<8x128xf32>
    %126 = arith.addf %124, %125 : vector<8x128xf32>
    %127 = arith.negf %126 : vector<8x128xf32>
    %128 = math.exp %127 : vector<8x128xf32>
    %cst_34 = arith.constant 1.000000e+00 : f32
    %129 = vector.broadcast %cst_34 : f32 to vector<8x128xf32>
    %130 = arith.addf %129, %128 : vector<8x128xf32>
    %131 = arith.divf %129, %130 : vector<8x128xf32>
    %132 = math.tanh %126 : vector<8x128xf32>
    %133 = vector.extract_strided_slice %131 {offsets = [0, 0], sizes = [8, 32], strides = [1, 1]} : vector<8x128xf32> to vector<8x32xf32>
    %134 = vector.extract_strided_slice %131 {offsets = [0, 32], sizes = [8, 32], strides = [1, 1]} : vector<8x128xf32> to vector<8x32xf32>
    %135 = vector.extract_strided_slice %132 {offsets = [0, 64], sizes = [8, 32], strides = [1, 1]} : vector<8x128xf32> to vector<8x32xf32>
    %136 = vector.extract_strided_slice %131 {offsets = [0, 96], sizes = [8, 32], strides = [1, 1]} : vector<8x128xf32> to vector<8x32xf32>
    %137 = arith.mulf %134, %117 : vector<8x32xf32>
    %138 = arith.mulf %133, %135 : vector<8x32xf32>
    %139 = arith.addf %137, %138 : vector<8x32xf32>
    %140 = math.tanh %139 : vector<8x32xf32>
    %141 = arith.mulf %136, %140 : vector<8x32xf32>
    %142 = arith.maximumf %120, %141 : vector<8x32xf32>
    %c6_i32 = arith.constant 6 : i32
    %c8_i32_35 = arith.constant 8 : i32
    %143 = arith.muli %c6_i32, %c8_i32_35 : i32
    %144 = tpu.assume_multiple %143, 8 : i32
    %145 = arith.index_cast %144 : i32 to index
    %c0_36 = arith.constant 0 : index
    %146 = vector.load %arg6[%145, %c0_36] : memref<64x128xf32, #tpu.memory_space<vmem>>, vector<8x128xf32>
    %cst_37 = arith.constant dense<0.000000e+00> : vector<8x128xf32>
    %147 = tpu.matmul %141, %7, %cst_37 {dimension_numbers = #tpu.dot_dimension_numbers<[1], [0], [0], [1], [0, 0, 1, 1], [], []>} : vector<8x32xf32>, vector<32x128xf32>, vector<8x128xf32> -> vector<8x128xf32>
    %148 = arith.addf %146, %147 : vector<8x128xf32>
    %149 = arith.negf %148 : vector<8x128xf32>
    %150 = math.exp %149 : vector<8x128xf32>
    %cst_38 = arith.constant 1.000000e+00 : f32
    %151 = vector.broadcast %cst_38 : f32 to vector<8x128xf32>
    %152 = arith.addf %151, %150 : vector<8x128xf32>
    %153 = arith.divf %151, %152 : vector<8x128xf32>
    %154 = math.tanh %148 : vector<8x128xf32>
    %155 = vector.extract_strided_slice %153 {offsets = [0, 0], sizes = [8, 32], strides = [1, 1]} : vector<8x128xf32> to vector<8x32xf32>
    %156 = vector.extract_strided_slice %153 {offsets = [0, 32], sizes = [8, 32], strides = [1, 1]} : vector<8x128xf32> to vector<8x32xf32>
    %157 = vector.extract_strided_slice %154 {offsets = [0, 64], sizes = [8, 32], strides = [1, 1]} : vector<8x128xf32> to vector<8x32xf32>
    %158 = vector.extract_strided_slice %153 {offsets = [0, 96], sizes = [8, 32], strides = [1, 1]} : vector<8x128xf32> to vector<8x32xf32>
    %159 = arith.mulf %156, %139 : vector<8x32xf32>
    %160 = arith.mulf %155, %157 : vector<8x32xf32>
    %161 = arith.addf %159, %160 : vector<8x32xf32>
    %162 = math.tanh %161 : vector<8x32xf32>
    %163 = arith.mulf %158, %162 : vector<8x32xf32>
    %164 = arith.maximumf %142, %163 : vector<8x32xf32>
    %c7_i32 = arith.constant 7 : i32
    %c8_i32_39 = arith.constant 8 : i32
    %165 = arith.muli %c7_i32, %c8_i32_39 : i32
    %166 = tpu.assume_multiple %165, 8 : i32
    %167 = arith.index_cast %166 : i32 to index
    %c0_40 = arith.constant 0 : index
    %168 = vector.load %arg6[%167, %c0_40] : memref<64x128xf32, #tpu.memory_space<vmem>>, vector<8x128xf32>
    %cst_41 = arith.constant dense<0.000000e+00> : vector<8x128xf32>
    %169 = tpu.matmul %163, %7, %cst_41 {dimension_numbers = #tpu.dot_dimension_numbers<[1], [0], [0], [1], [0, 0, 1, 1], [], []>} : vector<8x32xf32>, vector<32x128xf32>, vector<8x128xf32> -> vector<8x128xf32>
    %170 = arith.addf %168, %169 : vector<8x128xf32>
    %171 = arith.negf %170 : vector<8x128xf32>
    %172 = math.exp %171 : vector<8x128xf32>
    %cst_42 = arith.constant 1.000000e+00 : f32
    %173 = vector.broadcast %cst_42 : f32 to vector<8x128xf32>
    %174 = arith.addf %173, %172 : vector<8x128xf32>
    %175 = arith.divf %173, %174 : vector<8x128xf32>
    %176 = math.tanh %170 : vector<8x128xf32>
    %177 = vector.extract_strided_slice %175 {offsets = [0, 0], sizes = [8, 32], strides = [1, 1]} : vector<8x128xf32> to vector<8x32xf32>
    %178 = vector.extract_strided_slice %175 {offsets = [0, 32], sizes = [8, 32], strides = [1, 1]} : vector<8x128xf32> to vector<8x32xf32>
    %179 = vector.extract_strided_slice %176 {offsets = [0, 64], sizes = [8, 32], strides = [1, 1]} : vector<8x128xf32> to vector<8x32xf32>
    %180 = vector.extract_strided_slice %175 {offsets = [0, 96], sizes = [8, 32], strides = [1, 1]} : vector<8x128xf32> to vector<8x32xf32>
    %181 = arith.mulf %178, %161 : vector<8x32xf32>
    %182 = arith.mulf %177, %179 : vector<8x32xf32>
    %183 = arith.addf %181, %182 : vector<8x32xf32>
    %184 = math.tanh %183 : vector<8x32xf32>
    %185 = arith.mulf %180, %184 : vector<8x32xf32>
    %186 = arith.maximumf %164, %185 : vector<8x32xf32>
    %c8_i32_43 = arith.constant 8 : i32
    %c0_44 = arith.constant 0 : index
    %c0_45 = arith.constant 0 : index
    %187 = vector.load %arg5[%c0_44, %c0_45] : memref<8x32xf32, #tpu.memory_space<vmem>>, vector<8x32xf32>
    tpu.vector_store %arg5[%c0_44, %c0_45], %186 {strides = array<i32>} : memref<8x32xf32, #tpu.memory_space<vmem>>, vector<8x32xf32>,
    return
  }
  func.func @transform_0(%arg0: i32) -> (i32, i32) {
    %c0_i32 = arith.constant 0 : i32
    %c0_i32_0 = arith.constant 0 : i32
    %c0_i32_1 = arith.constant 0 : i32
    return %c0_i32, %c0_i32_0 : i32, i32
  }
  func.func @transform_1(%arg0: i32) -> (i32, i32) {
    %c0_i32 = arith.constant 0 : i32
    %c0_i32_0 = arith.constant 0 : i32
    %c0_i32_1 = arith.constant 0 : i32
    return %c0_i32, %c0_i32_0 : i32, i32
  }
  func.func @transform_2(%arg0: i32) -> (i32, i32) {
    %c0_i32 = arith.constant 0 : i32
    %c0_i32_0 = arith.constant 0 : i32
    %c0_i32_1 = arith.constant 0 : i32
    return %c0_i32, %c0_i32_0 : i32, i32
  }
  func.func @transform_3(%arg0: i32) -> (i32, i32) {
    %c0_i32 = arith.constant 0 : i32
    %c0_i32_0 = arith.constant 0 : i32
    %c0_i32_1 = arith.constant 0 : i32
    return %c0_i32, %c0_i32_0 : i32, i32
  }
  func.func @transform_4(%arg0: i32) -> (i32, i32) {
    %c0_i32 = arith.constant 0 : i32
    %c0_i32_0 = arith.constant 0 : i32
    %c0_i32_1 = arith.constant 0 : i32
    return %c0_i32, %c0_i32_0 : i32, i32
  }
}

</mosaic_0001>

<llo_original>
// kernel: tpu_custom_call.1
$region0: #{tpu_custom_call.1}
  #allocation0 [shape = 'u32[]', space=smem, size = 0x4, offset = 0x4, fixed_abs, tag = 'smem constant byte address 0x4 - core index']
  #allocation1 [shape = 'u32[144,128]{1,0:T(1,128)}', space=vmem, size = 0x12000, scoped, tag = 'internal scratch']
  #allocation2 [shape = 'f32[64,128]{1,0:T(8,128)}', space=vmem, size = 0x8000, scoped, tag = 'scratch operand']
  %s0 = inlined_call_operand.vmem [shape: f32[64,32], index: 0, kind: input, shape index: {}]
  %s1 = inlined_call_operand.vmem [shape: f32[32,128], index: 1, kind: input, shape index: {}]
  %s2 = inlined_call_operand.vmem [shape: f32[32,128], index: 2, kind: input, shape index: {}]
  %s3 = inlined_call_operand.vmem [shape: f32[1,128], index: 3, kind: input, shape index: {}]
  %s4 = inlined_call_operand.hbm [shape: f32[8,32], index: 4, kind: output, shape index: {}]
  %s5 = sld [smem:[#allocation0]]
  $region26: #{tpu_custom_call.1} parent=0
    _
  %s7 = ssub.s32 1, %s5
  %s8 = scalar_select 0, %s7, %s5
  $region1: #{tpu_custom_call.1} parent=0
    #allocation3 [shape = 'u8[4096]{0}', space=vmem, size = 0x1000, scoped, tag = 'output window, operand 0, single buffered']
    #allocation4 [shape = 's32[1]{0}', space=sflag, size = 0x4, scoped, tag = 'scoped memory for tpu_custom_call.1']
    %9 = vsyncpa [#allocation4], 0
    // Predicated region
    $region2: #{tpu_custom_call.1} parent=1 // pred_check
      _
    $region3: #{tpu_custom_call.1} parent=1 // pred_check_branch
      %11 = sbr.rel (0) target = $region5
    $region4: #{tpu_custom_call.1} parent=1 // pred_region
      _
    $region5: #{tpu_custom_call.1} parent=1 // pred_fallthru
      _
    // Predicated region
    $region6: #{tpu_custom_call.1} parent=1 // pred_check
      _
    $region7: #{tpu_custom_call.1} parent=1 // pred_check_branch
      %13 = sbr.rel (0) target = $region9
    $region8: #{tpu_custom_call.1} parent=1 // pred_region
      _
    $region9: #{tpu_custom_call.1} parent=1 // pred_fallthru
      _
    // Predicated region
    $region10: #{tpu_custom_call.1} parent=1 // pred_check
      _
    $region11: #{tpu_custom_call.1} parent=1 // pred_check_branch
      %15 = sbr.rel (0) target = $region13
    $region12: #{tpu_custom_call.1} parent=1 // pred_region
      _
    $region13: #{tpu_custom_call.1} parent=1 // pred_fallthru
      _
    // Predicated region
    $region14: #{tpu_custom_call.1} parent=1 // pred_check
      _
    $region15: #{tpu_custom_call.1} parent=1 // pred_check_branch
      %17 = sbr.rel (0) target = $region17
    $region16: #{tpu_custom_call.1} parent=1 // pred_region
      _
    $region17: #{tpu_custom_call.1} parent=1 // pred_fallthru
      _
    %v18 = vld [vmem:[%s0] sm:$0xff]
    %v19 = vld [vmem:[%s0 + $0x8] sm:$0xff]
    %v20 = vld [vmem:[%s0 + $0x10] sm:$0xff]
    %v21 = vld [vmem:[%s0 + $0x18] sm:$0xff]
    %v22 = vld [vmem:[%s0 + $0x20] sm:$0xff]
    %v23 = vld [vmem:[%s0 + $0x28] sm:$0xff]
    %v24 = vld [vmem:[%s0 + $0x30] sm:$0xff]
    %v25 = vld [vmem:[%s0 + $0x38] sm:$0xff]
    %v26 = vld [vmem:[%s1] sm:$0xff]
    %v27 = vld [vmem:[%s1 + $0x8] sm:$0xff]
    %v28 = vld [vmem:[%s1 + $0x10] sm:$0xff]
    %v29 = vld [vmem:[%s1 + $0x18] sm:$0xff]
    %v30 = vld [vmem:[%s3] sm:$0x1]
    %v32 = vlaneseq
    %v33 = vshrl.u32 %v32, 7
    %v34 = vsub.s32 0, %v33
    %v35 = vrot.slane %v30, %v34
    %vm37 = vcmask 261120
    %v39 = vsel %vm37, %v18, 0
    %v42 = vsel %vm37, %v19, 0
    %v45 = vsel %vm37, %v20, 0
    %v48 = vsel %vm37, %v21, 0
    %v51 = vsel %vm37, %v22, 0
    %v54 = vsel %vm37, %v23, 0
    %v57 = vsel %vm37, %v24, 0
    %v60 = vsel %vm37, %v25, 0
    %62 = vmatprep.subr.mxu0 0.0
    %63 = vmatpush1.msra.mxu0 %v26
    %64 = vmatprep.subr.mxu0 0.0
    %65 = vmatpush1.msra.mxu0 %v27
    %66 = vmatprep.subr.mxu0 0.0
    %67 = vmatpush1.msra.mxu0 %v28
    %68 = vmatprep.subr.mxu0 0.0
    %69 = vmatpush1.msra.mxu0 %v29
    %70 = vmatprep.subr.mxu0 0.0
    %71 = vmatpush1.msra.mxu0 0.0
    %72 = vmatprep.subr.mxu0 0.0
    %73 = vmatpush1.msra.mxu0 0.0
    %74 = vmatprep.subr.mxu0 0.0
    %75 = vmatpush1.msra.mxu0 0.0
    %76 = vmatprep.subr.mxu0 0.0
    %77 = vmatpush1.msra.mxu0 0.0
    %78 = vmatprep.subr.mxu0 0.0
    %79 = vmatpush1.msra.mxu0 0.0
    %80 = vmatprep.subr.mxu0 0.0
    %81 = vmatpush1.msra.mxu0 0.0
    %82 = vmatprep.subr.mxu0 0.0
    %83 = vmatpush1.msra.mxu0 0.0
    %84 = vmatprep.subr.mxu0 0.0
    %85 = vmatpush1.msra.mxu0 0.0
    %86 = vmatprep.subr.mxu0 0.0
    %87 = vmatpush1.msra.mxu0 0.0
    %88 = vmatprep.subr.mxu0 0.0
    %89 = vmatpush1.msra.mxu0 0.0
    %90 = vmatprep.subr.mxu0 0.0
    %91 = vmatpush1.msra.mxu0 0.0
    %92 = vmatprep.subr.mxu0 0.0
    %93 = vmatpush1.msra.mxu0 0.0
    %94 = vmatprep.subr.mxu0 0.0
    %95 = vmatpush1.msra.mxu0 0.0
    %96 = vmatprep.subr.mxu0 0.0
    %97 = vmatpush1.msra.mxu0 0.0
    %98 = vmatprep.subr.mxu0 0.0
    %99 = vmatpush1.msra.mxu0 0.0
    %100 = vmatprep.subr.mxu0 0.0
    %101 = vmatpush1.msra.mxu0 0.0
    %102 = vmatprep.subr.mxu0 0.0
    %103 = vmatpush1.msra.mxu0 0.0
    %104 = vmatprep.subr.mxu0 0.0
    %105 = vmatpush1.msra.mxu0 0.0
    %106 = vmatprep.subr.mxu0 0.0
    %107 = vmatpush1.msra.mxu0 0.0
    %108 = vmatprep.subr.mxu0 0.0
    %109 = vmatpush1.msra.mxu0 0.0
    %110 = vmatprep.subr.mxu0 0.0
    %111 = vmatpush1.msra.mxu0 0.0
    %112 = vmatprep.subr.mxu0 0.0
    %113 = vmatpush1.msra.mxu0 0.0
    %114 = vmatprep.subr.mxu0 0.0
    %115 = vmatpush1.msra.mxu0 0.0
    %116 = vmatprep.subr.mxu0 0.0
    %117 = vmatpush1.msra.mxu0 0.0
    %118 = vmatprep.subr.mxu0 0.0
    %119 = vmatpush1.msra.mxu0 0.0
    %120 = vmatprep.subr.mxu0 0.0
    %121 = vmatpush1.msra.mxu0 0.0
    %122 = vmatprep.subr.mxu0 0.0
    %123 = vmatpush1.msra.mxu0 0.0
    %124 = vmatprep.subr.mxu0 0.0
    %125 = vmatpush1.msra.mxu0 0.0
    %126 = vmatprep.mubr.f32.mxu0 0.0
    %127 = vmatmul.mubr.f32.gmra.mrb[0].mxu0 %v39
    %v128 = vpop.f32.mrb[0].mxu0
    %v129 = vadd.f32 %v35, %v128
    %v130 = vpop.f32.mrb[0].mxu0
    %131 = vmatprep.mubr.f32.mxu0 0.0
    %132 = vmatmul.mubr.f32.gmra.mrb[0].mxu0 %v42
    %v133 = vpop.f32.mrb[0].mxu0
    %v134 = vadd.f32 %v35, %v133
    %v135 = vpop.f32.mrb[0].mxu0
    %136 = vmatprep.mubr.f32.mxu0 0.0
    %137 = vmatmul.mubr.f32.gmra.mrb[0].mxu0 %v45
    %v138 = vpop.f32.mrb[0].mxu0
    %v139 = vadd.f32 %v35, %v138
    %v140 = vpop.f32.mrb[0].mxu0
    %141 = vmatprep.mubr.f32.mxu0 0.0
    %142 = vmatmul.mubr.f32.gmra.mrb[0].mxu0 %v48
    %v143 = vpop.f32.mrb[0].mxu0
    %v144 = vadd.f32 %v35, %v143
    %v145 = vpop.f32.mrb[0].mxu0
    %146 = vmatprep.mubr.f32.mxu0 0.0
    %147 = vmatmul.mubr.f32.gmra.mrb[0].mxu0 %v51
    %v148 = vpop.f32.mrb[0].mxu0
    %v149 = vadd.f32 %v35, %v148
    %v150 = vpop.f32.mrb[0].mxu0
    %151 = vmatprep.mubr.f32.mxu0 0.0
    %152 = vmatmul.mubr.f32.gmra.mrb[0].mxu0 %v54
    %v153 = vpop.f32.mrb[0].mxu0
    %v154 = vadd.f32 %v35, %v153
    %v155 = vpop.f32.mrb[0].mxu0
    %156 = vmatprep.mubr.f32.mxu0 0.0
    %157 = vmatmul.mubr.f32.gmra.mrb[0].mxu0 %v57
    %v158 = vpop.f32.mrb[0].mxu0
    %v159 = vadd.f32 %v35, %v158
    %v160 = vpop.f32.mrb[0].mxu0
    %161 = vmatprep.mubr.f32.mxu0 0.0
    %162 = vmatmul.mubr.f32.gmra.mrb[0].mxu0 %v60
    %v163 = vpop.f32.mrb[0].mxu0
    %v164 = vadd.f32 %v35, %v163
    %v165 = vpop.f32.mrb[0].mxu0
    %166 = vdwg.mxu0
    %167 = vst [vmem:[#allocation2] sm:$0xff] %v129
    %168 = vst [vmem:[#allocation2 + $0x8] sm:$0xff] %v134
    %169 = vst [vmem:[#allocation2 + $0x10] sm:$0xff] %v139
    %170 = vst [vmem:[#allocation2 + $0x18] sm:$0xff] %v144
    %171 = vst [vmem:[#allocation2 + $0x20] sm:$0xff] %v149
    %172 = vst [vmem:[#allocation2 + $0x28] sm:$0xff] %v154
    %173 = vst [vmem:[#allocation2 + $0x30] sm:$0xff] %v159
    %174 = vst [vmem:[#allocation2 + $0x38] sm:$0xff] %v164
    %v175 = vld [vmem:[%s2] sm:$0xff]
    %v176 = vld [vmem:[%s2 + $0x8] sm:$0xff]
    %v177 = vld [vmem:[%s2 + $0x10] sm:$0xff]
    %v178 = vld [vmem:[%s2 + $0x18] sm:$0xff]
    %v179 = vld [vmem:[#allocation2] sm:$0xff]
    %v181 = vsel %vm37, 0.0, 0
    %183 = vmatprep.subr.mxu0 0.0
    %184 = vmatpush1.msra.mxu0 %v175
    %185 = vmatprep.subr.mxu0 0.0
    %186 = vmatpush1.msra.mxu0 %v176
    %187 = vmatprep.subr.mxu0 0.0
    %188 = vmatpush1.msra.mxu0 %v177
    %189 = vmatprep.subr.mxu0 0.0
    %190 = vmatpush1.msra.mxu0 %v178
    %191 = vmatprep.subr.mxu0 0.0
    %192 = vmatpush1.msra.mxu0 0.0
    %193 = vmatprep.subr.mxu0 0.0
    %194 = vmatpush1.msra.mxu0 0.0
    %195 = vmatprep.subr.mxu0 0.0
    %196 = vmatpush1.msra.mxu0 0.0
    %197 = vmatprep.subr.mxu0 0.0
    %198 = vmatpush1.msra.mxu0 0.0
    %199 = vmatprep.subr.mxu0 0.0
    %200 = vmatpush1.msra.mxu0 0.0
    %201 = vmatprep.subr.mxu0 0.0
    %202 = vmatpush1.msra.mxu0 0.0
    %203 = vmatprep.subr.mxu0 0.0
    %204 = vmatpush1.msra.mxu0 0.0
    %205 = vmatprep.subr.mxu0 0.0
    %206 = vmatpush1.msra.mxu0 0.0
    %207 = vmatprep.subr.mxu0 0.0
    %208 = vmatpush1.msra.mxu0 0.0
    %209 = vmatprep.subr.mxu0 0.0
    %210 = vmatpush1.msra.mxu0 0.0
    %211 = vmatprep.subr.mxu0 0.0
    %212 = vmatpush1.msra.mxu0 0.0
    %213 = vmatprep.subr.mxu0 0.0
    %214 = vmatpush1.msra.mxu0 0.0
    %215 = vmatprep.subr.mxu0 0.0
    %216 = vmatpush1.msra.mxu0 0.0
    %217 = vmatprep.subr.mxu0 0.0
    %218 = vmatpush1.msra.mxu0 0.0
    %219 = vmatprep.subr.mxu0 0.0
    %220 = vmatpush1.msra.mxu0 0.0
    %221 = vmatprep.subr.mxu0 0.0
    %222 = vmatpush1.msra.mxu0 0.0
    %223 = vmatprep.subr.mxu0 0.0
    %224 = vmatpush1.msra.mxu0 0.0
    %225 = vmatprep.subr.mxu0 0.0
    %226 = vmatpush1.msra.mxu0 0.0
    %227 = vmatprep.subr.mxu0 0.0
    %228 = vmatpush1.msra.mxu0 0.0
    %229 = vmatprep.subr.mxu0 0.0
    %230 = vmatpush1.msra.mxu0 0.0
    %231 = vmatprep.subr.mxu0 0.0
    %232 = vmatpush1.msra.mxu0 0.0
    %233 = vmatprep.subr.mxu0 0.0
    %234 = vmatpush1.msra.mxu0 0.0
    %235 = vmatprep.subr.mxu0 0.0
    %236 = vmatpush1.msra.mxu0 0.0
    %237 = vmatprep.subr.mxu0 0.0
    %238 = vmatpush1.msra.mxu0 0.0
    %239 = vmatprep.subr.mxu0 0.0
    %240 = vmatpush1.msra.mxu0 0.0
    %241 = vmatprep.subr.mxu0 0.0
    %242 = vmatpush1.msra.mxu0 0.0
    %243 = vmatprep.subr.mxu0 0.0
    %244 = vmatpush1.msra.mxu0 0.0
    %245 = vmatprep.subr.mxu0 0.0
    %246 = vmatpush1.msra.mxu0 0.0
    %247 = vmatprep.mubr.f32.mxu0 0.0
    %248 = vmatmul.mubr.f32.gmra.mrb[0].mxu0 %v181
    %v249 = vpop.f32.mrb[0].mxu0
    %v250 = vadd.f32 0.0, %v249
    %v251 = vpop.f32.mrb[0].mxu0
    %252 = vdwg.mxu0
    %v253 = vadd.f32 %v179, %v250
    %v254 = vxor.u32 %v253, 2147483648
    %v255 = vmul.f32 %v254, 1.442695
    %v256 = vpow.pop %v255
    %v257 = vadd.f32 %v256, 1.0
    %v258 = vrcp.pop %v257
    %v259 = vmul.f32 1.0, %v258
    %v260 = vtanh.pop %v253
    %v261 = vmul.f32 %v259, 0.0
    %263 = vrot.lane.b32.xlu0 %v260, 64
    %v264 = vpop.permute.xlu0 %263
    %v266 = vmul.f32 %v259, %v264
    %268 = vrot.lane.b32.xlu0 %v266, 32
    %v269 = vpop.permute.xlu0 %268
    %v271 = vadd.f32 %v261, %v269
    %v272 = vtanh.pop %v271
    %274 = vrot.lane.b32.xlu0 %v272, 64
    %v275 = vpop.permute.xlu0 %274
    %v277 = vmul.f32 %v259, %v275
    %s278 = scalar_lea.vmem [#allocation2], 8
    %v279 = vld [vmem:[%s278] sm:$0xff]
    %281 = vrot.lane.b32.xlu0 %v277, 32
    %v282 = vpop.permute.xlu0 %281
    %v283 = vsel %vm37, %v282, 0
    %285 = vmatprep.subr.mxu0 0.0
    %286 = vmatpush1.msra.mxu0 %v175
    %287 = vmatprep.subr.mxu0 0.0
    %288 = vmatpush1.msra.mxu0 %v176
    %289 = vmatprep.subr.mxu0 0.0
    %290 = vmatpush1.msra.mxu0 %v177
    %291 = vmatprep.subr.mxu0 0.0
    %292 = vmatpush1.msra.mxu0 %v178
    %293 = vmatprep.subr.mxu0 0.0
    %294 = vmatpush1.msra.mxu0 0.0
    %295 = vmatprep.subr.mxu0 0.0
    %296 = vmatpush1.msra.mxu0 0.0
    %297 = vmatprep.subr.mxu0 0.0
    %298 = vmatpush1.msra.mxu0 0.0
    %299 = vmatprep.subr.mxu0 0.0
    %300 = vmatpush1.msra.mxu0 0.0
    %301 = vmatprep.subr.mxu0 0.0
    %302 = vmatpush1.msra.mxu0 0.0
    %303 = vmatprep.subr.mxu0 0.0
    %304 = vmatpush1.msra.mxu0 0.0
    %305 = vmatprep.subr.mxu0 0.0
    %306 = vmatpush1.msra.mxu0 0.0
    %307 = vmatprep.subr.mxu0 0.0
    %308 = vmatpush1.msra.mxu0 0.0
    %309 = vmatprep.subr.mxu0 0.0
    %310 = vmatpush1.msra.mxu0 0.0
    %311 = vmatprep.subr.mxu0 0.0
    %312 = vmatpush1.msra.mxu0 0.0
    %313 = vmatprep.subr.mxu0 0.0
    %314 = vmatpush1.msra.mxu0 0.0
    %315 = vmatprep.subr.mxu0 0.0
    %316 = vmatpush1.msra.mxu0 0.0
    %317 = vmatprep.subr.mxu0 0.0
    %318 = vmatpush1.msra.mxu0 0.0
    %319 = vmatprep.subr.mxu0 0.0
    %320 = vmatpush1.msra.mxu0 0.0
    %321 = vmatprep.subr.mxu0 0.0
    %322 = vmatpush1.msra.mxu0 0.0
    %323 = vmatprep.subr.mxu0 0.0
    %324 = vmatpush1.msra.mxu0 0.0
    %325 = vmatprep.subr.mxu0 0.0
    %326 = vmatpush1.msra.mxu0 0.0
    %327 = vmatprep.subr.mxu0 0.0
    %328 = vmatpush1.msra.mxu0 0.0
    %329 = vmatprep.subr.mxu0 0.0
    %330 = vmatpush1.msra.mxu0 0.0
    %331 = vmatprep.subr.mxu0 0.0
    %332 = vmatpush1.msra.mxu0 0.0
    %333 = vmatprep.subr.mxu0 0.0
    %334 = vmatpush1.msra.mxu0 0.0
    %335 = vmatprep.subr.mxu0 0.0
    %336 = vmatpush1.msra.mxu0 0.0
    %337 = vmatprep.subr.mxu0 0.0
    %338 = vmatpush1.msra.mxu0 0.0
    %339 = vmatprep.subr.mxu0 0.0
    %340 = vmatpush1.msra.mxu0 0.0
    %341 = vmatprep.subr.mxu0 0.0
    %342 = vmatpush1.msra.mxu0 0.0
    %343 = vmatprep.subr.mxu0 0.0
    %344 = vmatpush1.msra.mxu0 0.0
    %345 = vmatprep.subr.mxu0 0.0
    %346 = vmatpush1.msra.mxu0 0.0
    %347 = vmatprep.subr.mxu0 0.0
    %348 = vmatpush1.msra.mxu0 0.0
    %349 = vmatprep.mubr.f32.mxu0 0.0
    %350 = vmatmul.mubr.f32.gmra.mrb[0].mxu0 %v283
    %v351 = vpop.f32.mrb[0].mxu0
    %v352 = vadd.f32 0.0, %v351
    %v353 = vpop.f32.mrb[0].mxu0
    %354 = vdwg.mxu0
    %v355 = vadd.f32 %v279, %v352
    %v356 = vxor.u32 %v355, 2147483648
    %v357 = vmul.f32 %v356, 1.442695
    %v358 = vpow.pop %v357
    %v359 = vadd.f32 %v358, 1.0
    %v360 = vrcp.pop %v359
    %v361 = vmul.f32 1.0, %v360
    %v362 = vtanh.pop %v355
    %v363 = vmul.f32 %v361, %v271
    %365 = vrot.lane.b32.xlu0 %v362, 64
    %v366 = vpop.permute.xlu0 %365
    %v368 = vmul.f32 %v361, %v366
    %370 = vrot.lane.b32.xlu0 %v368, 32
    %v371 = vpop.permute.xlu0 %370
    %v373 = vadd.f32 %v363, %v371
    %v374 = vtanh.pop %v373
    %376 = vrot.lane.b32.xlu0 %v374, 64
    %v377 = vpop.permute.xlu0 %376
    %v379 = vmul.f32 %v361, %v377
    %v380 = vmax.f32 %v277, %v379
    %s381 = scalar_lea.vmem [#allocation2], 16
    %v382 = vld [vmem:[%s381] sm:$0xff]
    %384 = vrot.lane.b32.xlu0 %v379, 32
    %v385 = vpop.permute.xlu0 %384
    %v386 = vsel %vm37, %v385, 0
    %388 = vmatprep.subr.mxu0 0.0
    %389 = vmatpush1.msra.mxu0 %v175
    %390 = vmatprep.subr.mxu0 0.0
    %391 = vmatpush1.msra.mxu0 %v176
    %392 = vmatprep.subr.mxu0 0.0
    %393 = vmatpush1.msra.mxu0 %v177
    %394 = vmatprep.subr.mxu0 0.0
    %395 = vmatpush1.msra.mxu0 %v178
    %396 = vmatprep.subr.mxu0 0.0
    %397 = vmatpush1.msra.mxu0 0.0
    %398 = vmatprep.subr.mxu0 0.0
    %399 = vmatpush1.msra.mxu0 0.0
    %400 = vmatprep.subr.mxu0 0.0
    %401 = vmatpush1.msra.mxu0 0.0
    %402 = vmatprep.subr.mxu0 0.0
    %403 = vmatpush1.msra.mxu0 0.0
    %404 = vmatprep.subr.mxu0 0.0
    %405 = vmatpush1.msra.mxu0 0.0
    %406 = vmatprep.subr.mxu0 0.0
    %407 = vmatpush1.msra.mxu0 0.0
    %408 = vmatprep.subr.mxu0 0.0
    %409 = vmatpush1.msra.mxu0 0.0
    %410 = vmatprep.subr.mxu0 0.0
    %411 = vmatpush1.msra.mxu0 0.0
    %412 = vmatprep.subr.mxu0 0.0
    %413 = vmatpush1.msra.mxu0 0.0
    %414 = vmatprep.subr.mxu0 0.0
    %415 = vmatpush1.msra.mxu0 0.0
    %416 = vmatprep.subr.mxu0 0.0
    %417 = vmatpush1.msra.mxu0 0.0
    %418 = vmatprep.subr.mxu0 0.0
    %419 = vmatpush1.msra.mxu0 0.0
    %420 = vmatprep.subr.mxu0 0.0
    %421 = vmatpush1.msra.mxu0 0.0
    %422 = vmatprep.subr.mxu0 0.0
    %423 = vmatpush1.msra.mxu0 0.0
    %424 = vmatprep.subr.mxu0 0.0
    %425 = vmatpush1.msra.mxu0 0.0
    %426 = vmatprep.subr.mxu0 0.0
    %427 = vmatpush1.msra.mxu0 0.0
    %428 = vmatprep.subr.mxu0 0.0
    %429 = vmatpush1.msra.mxu0 0.0
    %430 = vmatprep.subr.mxu0 0.0
    %431 = vmatpush1.msra.mxu0 0.0
    %432 = vmatprep.subr.mxu0 0.0
    %433 = vmatpush1.msra.mxu0 0.0
    %434 = vmatprep.subr.mxu0 0.0
    %435 = vmatpush1.msra.mxu0 0.0
    %436 = vmatprep.subr.mxu0 0.0
    %437 = vmatpush1.msra.mxu0 0.0
    %438 = vmatprep.subr.mxu0 0.0
    %439 = vmatpush1.msra.mxu0 0.0
    %440 = vmatprep.subr.mxu0 0.0
    %441 = vmatpush1.msra.mxu0 0.0
    %442 = vmatprep.subr.mxu0 0.0
    %443 = vmatpush1.msra.mxu0 0.0
    %444 = vmatprep.subr.mxu0 0.0
    %445 = vmatpush1.msra.mxu0 0.0
    %446 = vmatprep.subr.mxu0 0.0
    %447 = vmatpush1.msra.mxu0 0.0
    %448 = vmatprep.subr.mxu0 0.0
    %449 = vmatpush1.msra.mxu0 0.0
    %450 = vmatprep.subr.mxu0 0.0
    %451 = vmatpush1.msra.mxu0 0.0
    %452 = vmatprep.mubr.f32.mxu0 0.0
    %453 = vmatmul.mubr.f32.gmra.mrb[0].mxu0 %v386
    %v454 = vpop.f32.mrb[0].mxu0
    %v455 = vadd.f32 0.0, %v454
    %v456 = vpop.f32.mrb[0].mxu0
    %457 = vdwg.mxu0
    %v458 = vadd.f32 %v382, %v455
    %v459 = vxor.u32 %v458, 2147483648
    %v460 = vmul.f32 %v459, 1.442695
    %v461 = vpow.pop %v460
    %v462 = vadd.f32 %v461, 1.0
    %v463 = vrcp.pop %v462
    %v464 = vmul.f32 1.0, %v463
    %v465 = vtanh.pop %v458
    %v466 = vmul.f32 %v464, %v373
    %468 = vrot.lane.b32.xlu0 %v465, 64
    %v469 = vpop.permute.xlu0 %468
    %v471 = vmul.f32 %v464, %v469
    %473 = vrot.lane.b32.xlu0 %v471, 32
    %v474 = vpop.permute.xlu0 %473
    %v476 = vadd.f32 %v466, %v474
    %v477 = vtanh.pop %v476
    %479 = vrot.lane.b32.xlu0 %v477, 64
    %v480 = vpop.permute.xlu0 %479
    %v482 = vmul.f32 %v464, %v480
    %v483 = vmax.f32 %v380, %v482
    %s484 = scalar_lea.vmem [#allocation2], 24
    %v485 = vld [vmem:[%s484] sm:$0xff]
    %487 = vrot.lane.b32.xlu0 %v482, 32
    %v488 = vpop.permute.xlu0 %487
    %v489 = vsel %vm37, %v488, 0
    %491 = vmatprep.subr.mxu0 0.0
    %492 = vmatpush1.msra.mxu0 %v175
    %493 = vmatprep.subr.mxu0 0.0
    %494 = vmatpush1.msra.mxu0 %v176
    %495 = vmatprep.subr.mxu0 0.0
    %496 = vmatpush1.msra.mxu0 %v177
    %497 = vmatprep.subr.mxu0 0.0
    %498 = vmatpush1.msra.mxu0 %v178
    %499 = vmatprep.subr.mxu0 0.0
    %500 = vmatpush1.msra.mxu0 0.0
    %501 = vmatprep.subr.mxu0 0.0
    %502 = vmatpush1.msra.mxu0 0.0
    %503 = vmatprep.subr.mxu0 0.0
    %504 = vmatpush1.msra.mxu0 0.0
    %505 = vmatprep.subr.mxu0 0.0
    %506 = vmatpush1.msra.mxu0 0.0
    %507 = vmatprep.subr.mxu0 0.0
    %508 = vmatpush1.msra.mxu0 0.0
    %509 = vmatprep.subr.mxu0 0.0
    %510 = vmatpush1.msra.mxu0 0.0
    %511 = vmatprep.subr.mxu0 0.0
    %512 = vmatpush1.msra.mxu0 0.0
    %513 = vmatprep.subr.mxu0 0.0
    %514 = vmatpush1.msra.mxu0 0.0
    %515 = vmatprep.subr.mxu0 0.0
    %516 = vmatpush1.msra.mxu0 0.0
    %517 = vmatprep.subr.mxu0 0.0
    %518 = vmatpush1.msra.mxu0 0.0
    %519 = vmatprep.subr.mxu0 0.0
    %520 = vmatpush1.msra.mxu0 0.0
    %521 = vmatprep.subr.mxu0 0.0
    %522 = vmatpush1.msra.mxu0 0.0
    %523 = vmatprep.subr.mxu0 0.0
    %524 = vmatpush1.msra.mxu0 0.0
    %525 = vmatprep.subr.mxu0 0.0
    %526 = vmatpush1.msra.mxu0 0.0
    %527 = vmatprep.subr.mxu0 0.0
    %528 = vmatpush1.msra.mxu0 0.0
    %529 = vmatprep.subr.mxu0 0.0
    %530 = vmatpush1.msra.mxu0 0.0
    %531 = vmatprep.subr.mxu0 0.0
    %532 = vmatpush1.msra.mxu0 0.0
    %533 = vmatprep.subr.mxu0 0.0
    %534 = vmatpush1.msra.mxu0 0.0
    %535 = vmatprep.subr.mxu0 0.0
    %536 = vmatpush1.msra.mxu0 0.0
    %537 = vmatprep.subr.mxu0 0.0
    %538 = vmatpush1.msra.mxu0 0.0
    %539 = vmatprep.subr.mxu0 0.0
    %540 = vmatpush1.msra.mxu0 0.0
    %541 = vmatprep.subr.mxu0 0.0
    %542 = vmatpush1.msra.mxu0 0.0
    %543 = vmatprep.subr.mxu0 0.0
    %544 = vmatpush1.msra.mxu0 0.0
    %545 = vmatprep.subr.mxu0 0.0
    %546 = vmatpush1.msra.mxu0 0.0
    %547 = vmatprep.subr.mxu0 0.0
    %548 = vmatpush1.msra.mxu0 0.0
    %549 = vmatprep.subr.mxu0 0.0
    %550 = vmatpush1.msra.mxu0 0.0
    %551 = vmatprep.subr.mxu0 0.0
    %552 = vmatpush1.msra.mxu0 0.0
    %553 = vmatprep.subr.mxu0 0.0
    %554 = vmatpush1.msra.mxu0 0.0
    %555 = vmatprep.mubr.f32.mxu0 0.0
    %556 = vmatmul.mubr.f32.gmra.mrb[0].mxu0 %v489
    %v557 = vpop.f32.mrb[0].mxu0
    %v558 = vadd.f32 0.0, %v557
    %v559 = vpop.f32.mrb[0].mxu0
    %560 = vdwg.mxu0
    %v561 = vadd.f32 %v485, %v558
    %v562 = vxor.u32 %v561, 2147483648
    %v563 = vmul.f32 %v562, 1.442695
    %v564 = vpow.pop %v563
    %v565 = vadd.f32 %v564, 1.0
    %v566 = vrcp.pop %v565
    %v567 = vmul.f32 1.0, %v566
    %v568 = vtanh.pop %v561
    %v569 = vmul.f32 %v567, %v476
    %571 = vrot.lane.b32.xlu0 %v568, 64
    %v572 = vpop.permute.xlu0 %571
    %v574 = vmul.f32 %v567, %v572
    %576 = vrot.lane.b32.xlu0 %v574, 32
    %v577 = vpop.permute.xlu0 %576
    %v579 = vadd.f32 %v569, %v577
    %v580 = vtanh.pop %v579
    %582 = vrot.lane.b32.xlu0 %v580, 64
    %v583 = vpop.permute.xlu0 %582
    %v585 = vmul.f32 %v567, %v583
    %v586 = vmax.f32 %v483, %v585
    %s587 = scalar_lea.vmem [#allocation2], 32
    %v588 = vld [vmem:[%s587] sm:$0xff]
    %590 = vrot.lane.b32.xlu0 %v585, 32
    %v591 = vpop.permute.xlu0 %590
    %v592 = vsel %vm37, %v591, 0
    %594 = vmatprep.subr.mxu0 0.0
    %595 = vmatpush1.msra.mxu0 %v175
    %596 = vmatprep.subr.mxu0 0.0
    %597 = vmatpush1.msra.mxu0 %v176
    %598 = vmatprep.subr.mxu0 0.0
    %599 = vmatpush1.msra.mxu0 %v177
    %600 = vmatprep.subr.mxu0 0.0
    %601 = vmatpush1.msra.mxu0 %v178
    %602 = vmatprep.subr.mxu0 0.0
    %603 = vmatpush1.msra.mxu0 0.0
    %604 = vmatprep.subr.mxu0 0.0
    %605 = vmatpush1.msra.mxu0 0.0
    %606 = vmatprep.subr.mxu0 0.0
    %607 = vmatpush1.msra.mxu0 0.0
    %608 = vmatprep.subr.mxu0 0.0
    %609 = vmatpush1.msra.mxu0 0.0
    %610 = vmatprep.subr.mxu0 0.0
    %611 = vmatpush1.msra.mxu0 0.0
    %612 = vmatprep.subr.mxu0 0.0
    %613 = vmatpush1.msra.mxu0 0.0
    %614 = vmatprep.subr.mxu0 0.0
    %615 = vmatpush1.msra.mxu0 0.0
    %616 = vmatprep.subr.mxu0 0.0
    %617 = vmatpush1.msra.mxu0 0.0
    %618 = vmatprep.subr.mxu0 0.0
    %619 = vmatpush1.msra.mxu0 0.0
    %620 = vmatprep.subr.mxu0 0.0
    %621 = vmatpush1.msra.mxu0 0.0
    %622 = vmatprep.subr.mxu0 0.0
    %623 = vmatpush1.msra.mxu0 0.0
    %624 = vmatprep.subr.mxu0 0.0
    %625 = vmatpush1.msra.mxu0 0.0
    %626 = vmatprep.subr.mxu0 0.0
    %627 = vmatpush1.msra.mxu0 0.0
    %628 = vmatprep.subr.mxu0 0.0
    %629 = vmatpush1.msra.mxu0 0.0
    %630 = vmatprep.subr.mxu0 0.0
    %631 = vmatpush1.msra.mxu0 0.0
    %632 = vmatprep.subr.mxu0 0.0
    %633 = vmatpush1.msra.mxu0 0.0
    %634 = vmatprep.subr.mxu0 0.0
    %635 = vmatpush1.msra.mxu0 0.0
    %636 = vmatprep.subr.mxu0 0.0
    %637 = vmatpush1.msra.mxu0 0.0
    %638 = vmatprep.subr.mxu0 0.0
    %639 = vmatpush1.msra.mxu0 0.0
    %640 = vmatprep.subr.mxu0 0.0
    %641 = vmatpush1.msra.mxu0 0.0
    %642 = vmatprep.subr.mxu0 0.0
    %643 = vmatpush1.msra.mxu0 0.0
    %644 = vmatprep.subr.mxu0 0.0
    %645 = vmatpush1.msra.mxu0 0.0
    %646 = vmatprep.subr.mxu0 0.0
    %647 = vmatpush1.msra.mxu0 0.0
    %648 = vmatprep.subr.mxu0 0.0
    %649 = vmatpush1.msra.mxu0 0.0
    %650 = vmatprep.subr.mxu0 0.0
    %651 = vmatpush1.msra.mxu0 0.0
    %652 = vmatprep.subr.mxu0 0.0
    %653 = vmatpush1.msra.mxu0 0.0
    %654 = vmatprep.subr.mxu0 0.0
    %655 = vmatpush1.msra.mxu0 0.0
    %656 = vmatprep.subr.mxu0 0.0
    %657 = vmatpush1.msra.mxu0 0.0
    %658 = vmatprep.mubr.f32.mxu0 0.0
    %659 = vmatmul.mubr.f32.gmra.mrb[0].mxu0 %v592
    %v660 = vpop.f32.mrb[0].mxu0
    %v661 = vadd.f32 0.0, %v660
    %v662 = vpop.f32.mrb[0].mxu0
    %663 = vdwg.mxu0
    %v664 = vadd.f32 %v588, %v661
    %v665 = vxor.u32 %v664, 2147483648
    %v666 = vmul.f32 %v665, 1.442695
    %v667 = vpow.pop %v666
    %v668 = vadd.f32 %v667, 1.0
    %v669 = vrcp.pop %v668
    %v670 = vmul.f32 1.0, %v669
    %v671 = vtanh.pop %v664
    %v672 = vmul.f32 %v670, %v579
    %674 = vrot.lane.b32.xlu0 %v671, 64
    %v675 = vpop.permute.xlu0 %674
    %v677 = vmul.f32 %v670, %v675
    %679 = vrot.lane.b32.xlu0 %v677, 32
    %v680 = vpop.permute.xlu0 %679
    %v682 = vadd.f32 %v672, %v680
    %v683 = vtanh.pop %v682
    %685 = vrot.lane.b32.xlu0 %v683, 64
    %v686 = vpop.permute.xlu0 %685
    %v688 = vmul.f32 %v670, %v686
    %v689 = vmax.f32 %v586, %v688
    %s690 = scalar_lea.vmem [#allocation2], 40
    %v691 = vld [vmem:[%s690] sm:$0xff]
    %693 = vrot.lane.b32.xlu0 %v688, 32
    %v694 = vpop.permute.xlu0 %693
    %v695 = vsel %vm37, %v694, 0
    %697 = vmatprep.subr.mxu0 0.0
    %698 = vmatpush1.msra.mxu0 %v175
    %699 = vmatprep.subr.mxu0 0.0
    %700 = vmatpush1.msra.mxu0 %v176
    %701 = vmatprep.subr.mxu0 0.0
    %702 = vmatpush1.msra.mxu0 %v177
    %703 = vmatprep.subr.mxu0 0.0
    %704 = vmatpush1.msra.mxu0 %v178
    %705 = vmatprep.subr.mxu0 0.0
    %706 = vmatpush1.msra.mxu0 0.0
    %707 = vmatprep.subr.mxu0 0.0
    %708 = vmatpush1.msra.mxu0 0.0
    %709 = vmatprep.subr.mxu0 0.0
    %710 = vmatpush1.msra.mxu0 0.0
    %711 = vmatprep.subr.mxu0 0.0
    %712 = vmatpush1.msra.mxu0 0.0
    %713 = vmatprep.subr.mxu0 0.0
    %714 = vmatpush1.msra.mxu0 0.0
    %715 = vmatprep.subr.mxu0 0.0
    %716 = vmatpush1.msra.mxu0 0.0
    %717 = vmatprep.subr.mxu0 0.0
    %718 = vmatpush1.msra.mxu0 0.0
    %719 = vmatprep.subr.mxu0 0.0
    %720 = vmatpush1.msra.mxu0 0.0
    %721 = vmatprep.subr.mxu0 0.0
    %722 = vmatpush1.msra.mxu0 0.0
    %723 = vmatprep.subr.mxu0 0.0
    %724 = vmatpush1.msra.mxu0 0.0
    %725 = vmatprep.subr.mxu0 0.0
    %726 = vmatpush1.msra.mxu0 0.0
    %727 = vmatprep.subr.mxu0 0.0
    %728 = vmatpush1.msra.mxu0 0.0
    %729 = vmatprep.subr.mxu0 0.0
    %730 = vmatpush1.msra.mxu0 0.0
    %731 = vmatprep.subr.mxu0 0.0
    %732 = vmatpush1.msra.mxu0 0.0
    %733 = vmatprep.subr.mxu0 0.0
    %734 = vmatpush1.msra.mxu0 0.0
    %735 = vmatprep.subr.mxu0 0.0
    %736 = vmatpush1.msra.mxu0 0.0
    %737 = vmatprep.subr.mxu0 0.0
    %738 = vmatpush1.msra.mxu0 0.0
    %739 = vmatprep.subr.mxu0 0.0
    %740 = vmatpush1.msra.mxu0 0.0
    %741 = vmatprep.subr.mxu0 0.0
    %742 = vmatpush1.msra.mxu0 0.0
    %743 = vmatprep.subr.mxu0 0.0
    %744 = vmatpush1.msra.mxu0 0.0
    %745 = vmatprep.subr.mxu0 0.0
    %746 = vmatpush1.msra.mxu0 0.0
    %747 = vmatprep.subr.mxu0 0.0
    %748 = vmatpush1.msra.mxu0 0.0
    %749 = vmatprep.subr.mxu0 0.0
    %750 = vmatpush1.msra.mxu0 0.0
    %751 = vmatprep.subr.mxu0 0.0
    %752 = vmatpush1.msra.mxu0 0.0
    %753 = vmatprep.subr.mxu0 0.0
    %754 = vmatpush1.msra.mxu0 0.0
    %755 = vmatprep.subr.mxu0 0.0
    %756 = vmatpush1.msra.mxu0 0.0
    %757 = vmatprep.subr.mxu0 0.0
    %758 = vmatpush1.msra.mxu0 0.0
    %759 = vmatprep.subr.mxu0 0.0
    %760 = vmatpush1.msra.mxu0 0.0
    %761 = vmatprep.mubr.f32.mxu0 0.0
    %762 = vmatmul.mubr.f32.gmra.mrb[0].mxu0 %v695
    %v763 = vpop.f32.mrb[0].mxu0
    %v764 = vadd.f32 0.0, %v763
    %v765 = vpop.f32.mrb[0].mxu0
    %766 = vdwg.mxu0
    %v767 = vadd.f32 %v691, %v764
    %v768 = vxor.u32 %v767, 2147483648
    %v769 = vmul.f32 %v768, 1.442695
    %v770 = vpow.pop %v769
    %v771 = vadd.f32 %v770, 1.0
    %v772 = vrcp.pop %v771
    %v773 = vmul.f32 1.0, %v772
    %v774 = vtanh.pop %v767
    %v775 = vmul.f32 %v773, %v682
    %777 = vrot.lane.b32.xlu0 %v774, 64
    %v778 = vpop.permute.xlu0 %777
    %v780 = vmul.f32 %v773, %v778
    %782 = vrot.lane.b32.xlu0 %v780, 32
    %v783 = vpop.permute.xlu0 %782
    %v785 = vadd.f32 %v775, %v783
    %v786 = vtanh.pop %v785
    %788 = vrot.lane.b32.xlu0 %v786, 64
    %v789 = vpop.permute.xlu0 %788
    %v791 = vmul.f32 %v773, %v789
    %v792 = vmax.f32 %v689, %v791
    %s793 = scalar_lea.vmem [#allocation2], 48
    %v794 = vld [vmem:[%s793] sm:$0xff]
    %796 = vrot.lane.b32.xlu0 %v791, 32
    %v797 = vpop.permute.xlu0 %796
    %v798 = vsel %vm37, %v797, 0
    %800 = vmatprep.subr.mxu0 0.0
    %801 = vmatpush1.msra.mxu0 %v175
    %802 = vmatprep.subr.mxu0 0.0
    %803 = vmatpush1.msra.mxu0 %v176
    %804 = vmatprep.subr.mxu0 0.0
    %805 = vmatpush1.msra.mxu0 %v177
    %806 = vmatprep.subr.mxu0 0.0
    %807 = vmatpush1.msra.mxu0 %v178
    %808 = vmatprep.subr.mxu0 0.0
    %809 = vmatpush1.msra.mxu0 0.0
    %810 = vmatprep.subr.mxu0 0.0
    %811 = vmatpush1.msra.mxu0 0.0
    %812 = vmatprep.subr.mxu0 0.0
    %813 = vmatpush1.msra.mxu0 0.0
    %814 = vmatprep.subr.mxu0 0.0
    %815 = vmatpush1.msra.mxu0 0.0
    %816 = vmatprep.subr.mxu0 0.0
    %817 = vmatpush1.msra.mxu0 0.0
    %818 = vmatprep.subr.mxu0 0.0
    %819 = vmatpush1.msra.mxu0 0.0
    %820 = vmatprep.subr.mxu0 0.0
    %821 = vmatpush1.msra.mxu0 0.0
    %822 = vmatprep.subr.mxu0 0.0
    %823 = vmatpush1.msra.mxu0 0.0
    %824 = vmatprep.subr.mxu0 0.0
    %825 = vmatpush1.msra.mxu0 0.0
    %826 = vmatprep.subr.mxu0 0.0
    %827 = vmatpush1.msra.mxu0 0.0
    %828 = vmatprep.subr.mxu0 0.0
    %829 = vmatpush1.msra.mxu0 0.0
    %830 = vmatprep.subr.mxu0 0.0
    %831 = vmatpush1.msra.mxu0 0.0
    %832 = vmatprep.subr.mxu0 0.0
    %833 = vmatpush1.msra.mxu0 0.0
    %834 = vmatprep.subr.mxu0 0.0
    %835 = vmatpush1.msra.mxu0 0.0
    %836 = vmatprep.subr.mxu0 0.0
    %837 = vmatpush1.msra.mxu0 0.0
    %838 = vmatprep.subr.mxu0 0.0
    %839 = vmatpush1.msra.mxu0 0.0
    %840 = vmatprep.subr.mxu0 0.0
    %841 = vmatpush1.msra.mxu0 0.0
    %842 = vmatprep.subr.mxu0 0.0
    %843 = vmatpush1.msra.mxu0 0.0
    %844 = vmatprep.subr.mxu0 0.0
    %845 = vmatpush1.msra.mxu0 0.0
    %846 = vmatprep.subr.mxu0 0.0
    %847 = vmatpush1.msra.mxu0 0.0
    %848 = vmatprep.subr.mxu0 0.0
    %849 = vmatpush1.msra.mxu0 0.0
    %850 = vmatprep.subr.mxu0 0.0
    %851 = vmatpush1.msra.mxu0 0.0
    %852 = vmatprep.subr.mxu0 0.0
    %853 = vmatpush1.msra.mxu0 0.0
    %854 = vmatprep.subr.mxu0 0.0
    %855 = vmatpush1.msra.mxu0 0.0
    %856 = vmatprep.subr.mxu0 0.0
    %857 = vmatpush1.msra.mxu0 0.0
    %858 = vmatprep.subr.mxu0 0.0
    %859 = vmatpush1.msra.mxu0 0.0
    %860 = vmatprep.subr.mxu0 0.0
    %861 = vmatpush1.msra.mxu0 0.0
    %862 = vmatprep.subr.mxu0 0.0
    %863 = vmatpush1.msra.mxu0 0.0
    %864 = vmatprep.mubr.f32.mxu0 0.0
    %865 = vmatmul.mubr.f32.gmra.mrb[0].mxu0 %v798
    %v866 = vpop.f32.mrb[0].mxu0
    %v867 = vadd.f32 0.0, %v866
    %v868 = vpop.f32.mrb[0].mxu0
    %869 = vdwg.mxu0
    %v870 = vadd.f32 %v794, %v867
    %v871 = vxor.u32 %v870, 2147483648
    %v872 = vmul.f32 %v871, 1.442695
    %v873 = vpow.pop %v872
    %v874 = vadd.f32 %v873, 1.0
    %v875 = vrcp.pop %v874
    %v876 = vmul.f32 1.0, %v875
    %v877 = vtanh.pop %v870
    %v878 = vmul.f32 %v876, %v785
    %880 = vrot.lane.b32.xlu0 %v877, 64
    %v881 = vpop.permute.xlu0 %880
    %v883 = vmul.f32 %v876, %v881
    %885 = vrot.lane.b32.xlu0 %v883, 32
    %v886 = vpop.permute.xlu0 %885
    %v888 = vadd.f32 %v878, %v886
    %v889 = vtanh.pop %v888
    %891 = vrot.lane.b32.xlu0 %v889, 64
    %v892 = vpop.permute.xlu0 %891
    %v894 = vmul.f32 %v876, %v892
    %v895 = vmax.f32 %v792, %v894
    %s896 = scalar_lea.vmem [#allocation2], 56
    %v897 = vld [vmem:[%s896] sm:$0xff]
    %899 = vrot.lane.b32.xlu0 %v894, 32
    %v900 = vpop.permute.xlu0 %899
    %v901 = vsel %vm37, %v900, 0
    %903 = vmatprep.subr.mxu0 0.0
    %904 = vmatpush1.msra.mxu0 %v175
    %905 = vmatprep.subr.mxu0 0.0
    %906 = vmatpush1.msra.mxu0 %v176
    %907 = vmatprep.subr.mxu0 0.0
    %908 = vmatpush1.msra.mxu0 %v177
    %909 = vmatprep.subr.mxu0 0.0
    %910 = vmatpush1.msra.mxu0 %v178
    %911 = vmatprep.subr.mxu0 0.0
    %912 = vmatpush1.msra.mxu0 0.0
    %913 = vmatprep.subr.mxu0 0.0
    %914 = vmatpush1.msra.mxu0 0.0
    %915 = vmatprep.subr.mxu0 0.0
    %916 = vmatpush1.msra.mxu0 0.0
    %917 = vmatprep.subr.mxu0 0.0
    %918 = vmatpush1.msra.mxu0 0.0
    %919 = vmatprep.subr.mxu0 0.0
    %920 = vmatpush1.msra.mxu0 0.0
    %921 = vmatprep.subr.mxu0 0.0
    %922 = vmatpush1.msra.mxu0 0.0
    %923 = vmatprep.subr.mxu0 0.0
    %924 = vmatpush1.msra.mxu0 0.0
    %925 = vmatprep.subr.mxu0 0.0
    %926 = vmatpush1.msra.mxu0 0.0
    %927 = vmatprep.subr.mxu0 0.0
    %928 = vmatpush1.msra.mxu0 0.0
    %929 = vmatprep.subr.mxu0 0.0
    %930 = vmatpush1.msra.mxu0 0.0
    %931 = vmatprep.subr.mxu0 0.0
    %932 = vmatpush1.msra.mxu0 0.0
    %933 = vmatprep.subr.mxu0 0.0
    %934 = vmatpush1.msra.mxu0 0.0
    %935 = vmatprep.subr.mxu0 0.0
    %936 = vmatpush1.msra.mxu0 0.0
    %937 = vmatprep.subr.mxu0 0.0
    %938 = vmatpush1.msra.mxu0 0.0
    %939 = vmatprep.subr.mxu0 0.0
    %940 = vmatpush1.msra.mxu0 0.0
    %941 = vmatprep.subr.mxu0 0.0
    %942 = vmatpush1.msra.mxu0 0.0
    %943 = vmatprep.subr.mxu0 0.0
    %944 = vmatpush1.msra.mxu0 0.0
    %945 = vmatprep.subr.mxu0 0.0
    %946 = vmatpush1.msra.mxu0 0.0
    %947 = vmatprep.subr.mxu0 0.0
    %948 = vmatpush1.msra.mxu0 0.0
    %949 = vmatprep.subr.mxu0 0.0
    %950 = vmatpush1.msra.mxu0 0.0
    %951 = vmatprep.subr.mxu0 0.0
    %952 = vmatpush1.msra.mxu0 0.0
    %953 = vmatprep.subr.mxu0 0.0
    %954 = vmatpush1.msra.mxu0 0.0
    %955 = vmatprep.subr.mxu0 0.0
    %956 = vmatpush1.msra.mxu0 0.0
    %957 = vmatprep.subr.mxu0 0.0
    %958 = vmatpush1.msra.mxu0 0.0
    %959 = vmatprep.subr.mxu0 0.0
    %960 = vmatpush1.msra.mxu0 0.0
    %961 = vmatprep.subr.mxu0 0.0
    %962 = vmatpush1.msra.mxu0 0.0
    %963 = vmatprep.subr.mxu0 0.0
    %964 = vmatpush1.msra.mxu0 0.0
    %965 = vmatprep.subr.mxu0 0.0
    %966 = vmatpush1.msra.mxu0 0.0
    %967 = vmatprep.mubr.f32.mxu0 0.0
    %968 = vmatmul.mubr.f32.gmra.mrb[0].mxu0 %v901
    %v969 = vpop.f32.mrb[0].mxu0
    %v970 = vadd.f32 0.0, %v969
    %v971 = vpop.f32.mrb[0].mxu0
    %972 = vdwg.mxu0
    %v973 = vadd.f32 %v897, %v970
    %v974 = vxor.u32 %v973, 2147483648
    %v975 = vmul.f32 %v974, 1.442695
    %v976 = vpow.pop %v975
    %v977 = vadd.f32 %v976, 1.0
    %v978 = vrcp.pop %v977
    %v979 = vmul.f32 1.0, %v978
    %v980 = vtanh.pop %v973
    %v981 = vmul.f32 %v979, %v888
    %983 = vrot.lane.b32.xlu0 %v980, 64
    %v984 = vpop.permute.xlu0 %983
    %v986 = vmul.f32 %v979, %v984
    %988 = vrot.lane.b32.xlu0 %v986, 32
    %v989 = vpop.permute.xlu0 %988
    %v991 = vadd.f32 %v981, %v989
    %v992 = vtanh.pop %v991
    %994 = vrot.lane.b32.xlu0 %v992, 64
    %v995 = vpop.permute.xlu0 %994
    %v997 = vmul.f32 %v979, %v995
    %v998 = vmax.f32 %v895, %v997
    %1000 = vrot.lane.b32.xlu0 %v998, 32
    %v1001 = vpop.permute.xlu0 %1000
    %1003 = vst.msk [vmem:[#allocation3] sm:$0xff] %vm37, %v1001
    // Predicated region
    $region18: #{tpu_custom_call.1} parent=1 // pred_check
      _
    $region19: #{tpu_custom_call.1} parent=1 // pred_check_branch
      %1005 = sbr.rel (0) target = $region21
    $region20: #{tpu_custom_call.1} parent=1 // pred_region
      %s1007 = ssub.s32 128, 128
      %1008 = vsyncadd [#allocation4], %s1007
      %s1010 = sshll.u32 [#allocation3], 4
      %s1011 = int_to_ptr.vmem [resolvable:$true] %s1010
      %1013 = dma.vmem_to_hbm [thread:$0]  %s1011, 128, %s4, [#allocation4]
    $region21: #{tpu_custom_call.1} parent=1 // pred_fallthru
      _
    // Predicated region
    $region22: #{tpu_custom_call.1} parent=1 // pred_check
      _
    $region23: #{tpu_custom_call.1} parent=1 // pred_check_branch
      %1015 = sbr.rel (0) target = $region25
    $region24: #{tpu_custom_call.1} parent=1 // pred_region
      %1016 = dma.done [#allocation4], 128
    $region25: #{tpu_custom_call.1} parent=1 // pred_fallthru
      _
    %1017 = vsyncpa [#allocation4], 1

</llo_original>
